<compile_context>
chip_gen: v7x
topology: tpu7x:2x2x1
jax: 0.10.0
libtpu: 0.0.40
codegen_flags: <defaults>
</compile_context>

<pallas_src>
import jax
import jax.numpy as jnp
from jax.experimental import pallas as pl
from jax.experimental.pallas import tpu as pltpu

LOG2E = 1.4426950408889634


# --------------------------------------------------------------------------
# helpers
# --------------------------------------------------------------------------
def _tpu_vmem_bytes():
    """Best-effort VMEM capacity query; conservative (v7x-sized) fallback."""
    try:
        return int(pltpu.get_tpu_info().vmem_capacity_bytes)
    except Exception:
        return 64 * 1024 * 1024


def _pick_tile(n, big_vmem):
    """Largest tile that divides n. >=256 preferred (MXU N saturation on
    v6e/v7x); 1024 only where v5e/v6e's 128 MiB VMEM allows it."""
    candidates = (1024, 512, 256, 128) if big_vmem else (512, 256, 128)
    for t in candidates:
        if n % t == 0:
            return t
    # TODO(synk): non-128-aligned n falls back to one whole-sequence tile; add
    # padding/masking for large ragged sequences.
    return n


def _buffered_block_spec(block_shape, index_map, depth=3):
    """BlockSpec with deeper multi-buffering; plain BlockSpec fallback."""
    try:
        return pl.BlockSpec(block_shape, index_map,
                            pipeline_mode=pl.Buffered(depth))
    except (TypeError, AttributeError):
        return pl.BlockSpec(block_shape, index_map)


# --------------------------------------------------------------------------
# Kernel 1: QKV projection, all 3*heads slabs per grid step.
#   x_ref   : (1, tn, dim)                      bf16
#   w_ref   : (3*heads, dim, dim_head)          bf16 (Q pre-scaled by scale*log2e)
#   qkv_ref : (1, 3*heads, tn, dim_head)        bf16
# --------------------------------------------------------------------------
def _make_qkv_kernel(n_slabs):
    def kernel(x_ref, w_ref, qkv_ref):
        x = x_ref[0]  # (tn, dim), shared across all slabs this step
        # TODO(synk): at dim_head < 128 each per-slab matmul uses only dim_head
        # of the MXU output lanes; a single (tn,dim)@(dim,3*inner) GEMM plus an
        # in-kernel repack would saturate lanes at the cost of XLU transposes.
        for j in range(n_slabs):
            qkv_ref[0, j] = jnp.dot(
                x, w_ref[j], preferred_element_type=jnp.float32
            ).astype(qkv_ref.dtype)
    return kernel


# --------------------------------------------------------------------------
# Kernel 2: flash attention (online softmax, exp2 domain) + per-head output
# projection.  Grid: (batch, q_tiles, heads, kv_tiles); heads & kv reduce.
#   q_ref, k_ref, v_ref : (1, 1, t, dim_head)   bf16 (Q already scaled*log2e)
#   wout_ref            : (1, dim_head, dim)    bf16
#   bout_ref            : (1, dim)              f32
#   o_ref               : (1, tq, dim)          x.dtype
# Scratch (persist across grid steps of one (batch, q_tile) group), all f32:
#   m_scr (tq,1)  l_scr (tq,1)  acc_scr (tq,dim_head)  oacc_scr (tq,dim)
# --------------------------------------------------------------------------
def _flash_attn_kernel(q_ref, k_ref, v_ref, wout_ref, bout_ref, o_ref,
                       m_scr, l_scr, acc_scr, oacc_scr):
    ih = pl.program_id(2)
    ik = pl.program_id(3)
    nh = pl.num_programs(2)
    nk = pl.num_programs(3)

    @pl.when(jnp.logical_and(ih == 0, ik == 0))
    def _init_output_acc():
        oacc_scr[...] = jnp.zeros(oacc_scr.shape, dtype=oacc_scr.dtype)

    @pl.when(ik == 0)
    def _init_head_state():
        m_scr[...] = jnp.full(m_scr.shape, -jnp.inf, dtype=m_scr.dtype)
        l_scr[...] = jnp.zeros(l_scr.shape, dtype=l_scr.dtype)
        acc_scr[...] = jnp.zeros(acc_scr.shape, dtype=acc_scr.dtype)

    q = q_ref[0, 0]          # (tq, d) bf16, scale*log2e folded into weights
    k = k_ref[0, 0]          # (tk, d) bf16
    v = v_ref[0, 0]          # (tk, d) bf16

    # scores in the log2 domain (tq, tk): contract over dim_head, f32 MXU acc.
    s = jax.lax.dot_general(q, k, (((1,), (1,)), ((), ())),
                            preferred_element_type=jnp.float32)

    m_prev = m_scr[...]
    m_new = jnp.maximum(m_prev, jnp.max(s, axis=-1, keepdims=True))
    alpha = jnp.exp2(m_prev - m_new)                    # rescale factor (f32)
    p = jnp.exp2(s - m_new)                             # un-normalized probs
    l_scr[...] = alpha * l_scr[...] + jnp.sum(p, axis=-1, keepdims=True)
    acc_scr[...] = alpha * acc_scr[...] + jnp.dot(
        p.astype(v.dtype), v, preferred_element_type=jnp.float32)
    m_scr[...] = m_new

    @pl.when(ik == nk - 1)
    def _finish_head():
        # Normalize with approximate reciprocal (EUP), then fold this head's
        # contribution into the output-projection accumulator (MXU work only,
        # no head-concat transpose needed).
        out_h = acc_scr[...] * pl.reciprocal(l_scr[...], approx=True)
        w_o = wout_ref[0]                               # (dim_head, dim) bf16
        oacc_scr[...] += jnp.dot(out_h.astype(w_o.dtype), w_o,
                                 preferred_element_type=jnp.float32)

    @pl.when(jnp.logical_and(ih == nh - 1, ik == nk - 1))
    def _finish_tile():
        o_ref[0] = (oacc_scr[...] + bout_ref[...]).astype(o_ref.dtype)


# --------------------------------------------------------------------------
# Host-side wrapper
# --------------------------------------------------------------------------
def prepare_attention_params(w_qkv, w_out, b_out, *, heads, dim_head,
                             compute_dtype=jnp.bfloat16):
    """One-time weight re-layout (hoist out of the per-call path).

    w_qkv : (dim, 3*heads*dim_head)  to_qkv weight (math layout, no bias)
    w_out : (heads*dim_head, dim)    to_out Linear weight (math layout)
    b_out : (dim,) or (1, dim)       to_out Linear bias
    """
    dim = w_qkv.shape[0]
    inner = heads * dim_head
    assert w_qkv.shape == (dim, 3 * inner)
    assert w_out.shape == (inner, dim)
    scale = float(dim_head) ** -0.5

    # to_qkv columns: [q | k | v], each block head-major (h, d).
    w3 = w_qkv.reshape(dim, 3, heads, dim_head).transpose(1, 2, 0, 3)  # (3,h,dim,d)
    w3 = w3.at[0].multiply(scale * LOG2E)   # fold softmax scale & log2(e) into Q
    w3 = w3.reshape(3 * heads, dim, dim_head).astype(compute_dtype)
    w_out_h = w_out.reshape(heads, dim_head, dim).astype(compute_dtype)
    b_out_f32 = b_out.reshape(1, dim).astype(jnp.float32)
    return w3, w_out_h, b_out_f32


def attention_forward(x, w3, w_out_h, b_out, *, compute_dtype=jnp.bfloat16):
    """Forward of the PyTorch Attention module (mask=None, dropout=0)."""
    b, n, dim = x.shape
    three_heads, dim_w, dim_head = w3.shape
    assert dim_w == dim
    heads = three_heads // 3

    vmem_cap = _tpu_vmem_bytes()
    big_vmem = vmem_cap >= 100 * 1024 * 1024   # v5e/v6e (128 MiB); not v7x (64 MiB)
    vmem_limit = (64 if big_vmem else 32) * 1024 * 1024

    x_c = x.astype(compute_dtype)

    # ---- 1) QKV projection -> (b, 3*heads, n, dim_head) -------------------
    tn = _pick_tile(n, big_vmem)
    qkv = pl.pallas_call(
        _make_qkv_kernel(3 * heads),
        out_shape=jax.ShapeDtypeStruct((b, 3 * heads, n, dim_head), compute_dtype),
        grid=(b, n // tn),
        in_specs=[
            pl.BlockSpec((1, tn, dim), lambda ib, it: (ib, it, 0)),
            pl.BlockSpec((3 * heads, dim, dim_head), lambda ib, it: (0, 0, 0)),
        ],
        out_specs=pl.BlockSpec((1, 3 * heads, tn, dim_head),
                               lambda ib, it: (ib, 0, it, 0)),
        compiler_params=pltpu.CompilerParams(
            dimension_semantics=("parallel", "parallel"),
            vmem_limit_bytes=vmem_limit),
    )(x_c, w3)

    # ---- 2) flash attention + output projection ---------------------------
    tq = _pick_tile(n, big_vmem)
    tk = tq
    nq = n // tq
    nk = n // tk

    q_spec = pl.BlockSpec((1, 1, tq, dim_head),
                          lambda ib, iq, ih, ik: (ib, ih, iq, 0))
    k_spec = _buffered_block_spec(
        (1, 1, tk, dim_head), lambda ib, iq, ih, ik: (ib, heads + ih, ik, 0))
    v_spec = _buffered_block_spec(
        (1, 1, tk, dim_head), lambda ib, iq, ih, ik: (ib, 2 * heads + ih, ik, 0))
    wout_spec = pl.BlockSpec((1, dim_head, dim),
                             lambda ib, iq, ih, ik: (ih, 0, 0))
    bout_spec = pl.BlockSpec((1, dim), lambda ib, iq, ih, ik: (0, 0))

    out = pl.pallas_call(
        _flash_attn_kernel,
        out_shape=jax.ShapeDtypeStruct((b, n, dim), x.dtype),
        grid=(b, nq, heads, nk),
        in_specs=[q_spec, k_spec, v_spec, wout_spec, bout_spec],
        out_specs=pl.BlockSpec((1, tq, dim),
                               lambda ib, iq, ih, ik: (ib, iq, 0)),
        scratch_shapes=[
            pltpu.VMEM((tq, 1), jnp.float32),          # running max (log2 domain)
            pltpu.VMEM((tq, 1), jnp.float32),          # running sum
            pltpu.VMEM((tq, dim_head), jnp.float32),   # per-head PV accumulator
            pltpu.VMEM((tq, dim), jnp.float32),        # cross-head output accum
        ],
        compiler_params=pltpu.CompilerParams(
            dimension_semantics=("parallel", "parallel", "arbitrary", "arbitrary"),
            vmem_limit_bytes=vmem_limit),
    )(qkv, qkv, qkv, w_out_h, b_out)
    return out


def attention_pallas(x, w_qkv, w_out, b_out, *, heads, dim_head,
                     compute_dtype=jnp.bfloat16):
    """Convenience wrapper: prepare params (ideally hoisted) + forward."""
    params = prepare_attention_params(w_qkv, w_out, b_out, heads=heads,
                                      dim_head=dim_head,
                                      compute_dtype=compute_dtype)
    return attention_forward(x, *params, compute_dtype=compute_dtype)


def attention_reference(x, w_qkv, w_out, b_out, *, heads, dim_head):
    """Pure-JAX f32 reference matching the PyTorch forward (mask=None)."""
    b, n, dim = x.shape
    inner = heads * dim_head
    scale = float(dim_head) ** -0.5
    qkv = jnp.dot(x, w_qkv)                                  # (b, n, 3*inner)
    q, k, v = jnp.split(qkv, 3, axis=-1)

    def split_heads(t):  # 'b n (h d) -> b h n d'
        return t.reshape(b, n, heads, dim_head).transpose(0, 2, 1, 3)

    q, k, v = map(split_heads, (q, k, v))
    dots = jnp.einsum('bhid,bhjd->bhij', q, k) * scale
    attn = jax.nn.softmax(dots, axis=-1)
    out = jnp.einsum('bhij,bhjd->bhid', attn, v)
    out = out.transpose(0, 2, 1, 3).reshape(b, n, inner)     # 'b h n d -> b n (h d)'
    return jnp.dot(out, w_out) + b_out.reshape(1, dim)


if __name__ == "__main__":
    # Small, module-consistent shapes.
    batch, seq, dim = 2, 8, 32
    heads, dim_head = 4, 8
    inner = heads * dim_head

    key = jax.random.PRNGKey(0)
    kx, kqkv, kwo, kbo = jax.random.split(key, 4)

    x = jax.random.normal(kx, (batch, seq, dim), dtype=jnp.float32)
    w_qkv = 0.1 * jax.random.normal(kqkv, (dim, 3 * inner), dtype=jnp.float32)
    w_out = 0.1 * jax.random.normal(kwo, (inner, dim), dtype=jnp.float32)
    b_out = 0.1 * jax.random.normal(kbo, (1, dim), dtype=jnp.float32)

    # Weight re-layout done once (hoisted), then the forward call.
    w3, w_out_h, b_out_p = prepare_attention_params(
        w_qkv, w_out, b_out, heads=heads, dim_head=dim_head)
    out = attention_forward(x, w3, w_out_h, b_out_p)
    out = jax.block_until_ready(out)

    ref = attention_reference(x, w_qkv, w_out, b_out, heads=heads, dim_head=dim_head)
    assert out.shape == (batch, seq, dim)
    # Tolerance accommodates the bf16 compute pipeline and
    # pl.reciprocal(approx=True) in the softmax normalization.
    assert jnp.allclose(out, ref, atol=2.5e-2, rtol=2.5e-2), "mismatch vs reference"

    print("KERNEL_OK")
</pallas_src>

<mosaic_0001>
module attributes {stable_mosaic.version = 11 : i64} {
  func.func @kernel(%arg0: i32, %arg1: i32, %arg2: memref<1x8x32xbf16, #tpu.memory_space<vmem>>, %arg3: memref<12x32x8xbf16, #tpu.memory_space<vmem>>, %arg4: memref<1x12x8x8xbf16, #tpu.memory_space<vmem>>) attributes {dimension_semantics = [#tpu.dimension_semantics<parallel>, #tpu.dimension_semantics<parallel>], iteration_bounds = array<i64: 2, 1>, scalar_prefetch = 0 : i64, scratch_operands = 0 : i64, tpu.core_type = #tpu.core_type<tc>, window_params = [{transform_indices = @transform_0, window_bounds = array<i64: 1, 8, 32>}, {pipeline_mode = #tpu.pipeline_mode<synchronous>, transform_indices = @transform_1, window_bounds = array<i64: 12, 32, 8>}, {transform_indices = @transform_2, window_bounds = array<i64: 1, 12, 8, 8>}]} {
    %c0 = arith.constant 0 : index
    %c0_0 = arith.constant 0 : index
    %c0_1 = arith.constant 0 : index
    %0 = vector.load %arg2[%c0, %c0_0, %c0_1] : memref<1x8x32xbf16, #tpu.memory_space<vmem>>, vector<1x8x32xbf16>
    %1 = vector.shape_cast %0 : vector<1x8x32xbf16> to vector<8x32xbf16>
    %c0_2 = arith.constant 0 : index
    %c0_3 = arith.constant 0 : index
    %c0_4 = arith.constant 0 : index
    %2 = vector.load %arg3[%c0_2, %c0_3, %c0_4] : memref<12x32x8xbf16, #tpu.memory_space<vmem>>, vector<1x32x8xbf16>
    %3 = vector.shape_cast %2 : vector<1x32x8xbf16> to vector<32x8xbf16>
    %cst = arith.constant dense<0.000000e+00> : vector<8x8xf32>
    %4 = tpu.matmul %1, %3, %cst {dimension_numbers = #tpu.dot_dimension_numbers<[1], [0], [0], [1], [0, 0, 1, 1], [], []>} : vector<8x32xbf16>, vector<32x8xbf16>, vector<8x8xf32> -> vector<8x8xf32>
    %5 = arith.truncf %4 : vector<8x8xf32> to vector<8x8xbf16>
    %c0_5 = arith.constant 0 : index
    %c0_6 = arith.constant 0 : index
    %c0_7 = arith.constant 0 : index
    %c0_8 = arith.constant 0 : index
    %6 = vector.load %arg4[%c0_5, %c0_6, %c0_7, %c0_8] : memref<1x12x8x8xbf16, #tpu.memory_space<vmem>>, vector<1x1x8x8xbf16>
    %7 = vector.shape_cast %6 : vector<1x1x8x8xbf16> to vector<8x8xbf16>
    %8 = vector.shape_cast %5 : vector<8x8xbf16> to vector<1x1x8x8xbf16>
    tpu.vector_store %arg4[%c0_5, %c0_6, %c0_7, %c0_8], %8 {strides = array<i32>} : memref<1x12x8x8xbf16, #tpu.memory_space<vmem>>, vector<1x1x8x8xbf16>,
    %c1 = arith.constant 1 : index
    %c0_9 = arith.constant 0 : index
    %c0_10 = arith.constant 0 : index
    %9 = vector.load %arg3[%c1, %c0_9, %c0_10] : memref<12x32x8xbf16, #tpu.memory_space<vmem>>, vector<1x32x8xbf16>
    %10 = vector.shape_cast %9 : vector<1x32x8xbf16> to vector<32x8xbf16>
    %cst_11 = arith.constant dense<0.000000e+00> : vector<8x8xf32>
    %11 = tpu.matmul %1, %10, %cst_11 {dimension_numbers = #tpu.dot_dimension_numbers<[1], [0], [0], [1], [0, 0, 1, 1], [], []>} : vector<8x32xbf16>, vector<32x8xbf16>, vector<8x8xf32> -> vector<8x8xf32>
    %12 = arith.truncf %11 : vector<8x8xf32> to vector<8x8xbf16>
    %c0_12 = arith.constant 0 : index
    %c1_13 = arith.constant 1 : index
    %c0_14 = arith.constant 0 : index
    %c0_15 = arith.constant 0 : index
    %13 = vector.load %arg4[%c0_12, %c1_13, %c0_14, %c0_15] : memref<1x12x8x8xbf16, #tpu.memory_space<vmem>>, vector<1x1x8x8xbf16>
    %14 = vector.shape_cast %13 : vector<1x1x8x8xbf16> to vector<8x8xbf16>
    %15 = vector.shape_cast %12 : vector<8x8xbf16> to vector<1x1x8x8xbf16>
    tpu.vector_store %arg4[%c0_12, %c1_13, %c0_14, %c0_15], %15 {strides = array<i32>} : memref<1x12x8x8xbf16, #tpu.memory_space<vmem>>, vector<1x1x8x8xbf16>,
    %c2 = arith.constant 2 : index
    %c0_16 = arith.constant 0 : index
    %c0_17 = arith.constant 0 : index
    %16 = vector.load %arg3[%c2, %c0_16, %c0_17] : memref<12x32x8xbf16, #tpu.memory_space<vmem>>, vector<1x32x8xbf16>
    %17 = vector.shape_cast %16 : vector<1x32x8xbf16> to vector<32x8xbf16>
    %cst_18 = arith.constant dense<0.000000e+00> : vector<8x8xf32>
    %18 = tpu.matmul %1, %17, %cst_18 {dimension_numbers = #tpu.dot_dimension_numbers<[1], [0], [0], [1], [0, 0, 1, 1], [], []>} : vector<8x32xbf16>, vector<32x8xbf16>, vector<8x8xf32> -> vector<8x8xf32>
    %19 = arith.truncf %18 : vector<8x8xf32> to vector<8x8xbf16>
    %c0_19 = arith.constant 0 : index
    %c2_20 = arith.constant 2 : index
    %c0_21 = arith.constant 0 : index
    %c0_22 = arith.constant 0 : index
    %20 = vector.load %arg4[%c0_19, %c2_20, %c0_21, %c0_22] : memref<1x12x8x8xbf16, #tpu.memory_space<vmem>>, vector<1x1x8x8xbf16>
    %21 = vector.shape_cast %20 : vector<1x1x8x8xbf16> to vector<8x8xbf16>
    %22 = vector.shape_cast %19 : vector<8x8xbf16> to vector<1x1x8x8xbf16>
    tpu.vector_store %arg4[%c0_19, %c2_20, %c0_21, %c0_22], %22 {strides = array<i32>} : memref<1x12x8x8xbf16, #tpu.memory_space<vmem>>, vector<1x1x8x8xbf16>,
    %c3 = arith.constant 3 : index
    %c0_23 = arith.constant 0 : index
    %c0_24 = arith.constant 0 : index
    %23 = vector.load %arg3[%c3, %c0_23, %c0_24] : memref<12x32x8xbf16, #tpu.memory_space<vmem>>, vector<1x32x8xbf16>
    %24 = vector.shape_cast %23 : vector<1x32x8xbf16> to vector<32x8xbf16>
    %cst_25 = arith.constant dense<0.000000e+00> : vector<8x8xf32>
    %25 = tpu.matmul %1, %24, %cst_25 {dimension_numbers = #tpu.dot_dimension_numbers<[1], [0], [0], [1], [0, 0, 1, 1], [], []>} : vector<8x32xbf16>, vector<32x8xbf16>, vector<8x8xf32> -> vector<8x8xf32>
    %26 = arith.truncf %25 : vector<8x8xf32> to vector<8x8xbf16>
    %c0_26 = arith.constant 0 : index
    %c3_27 = arith.constant 3 : index
    %c0_28 = arith.constant 0 : index
    %c0_29 = arith.constant 0 : index
    %27 = vector.load %arg4[%c0_26, %c3_27, %c0_28, %c0_29] : memref<1x12x8x8xbf16, #tpu.memory_space<vmem>>, vector<1x1x8x8xbf16>
    %28 = vector.shape_cast %27 : vector<1x1x8x8xbf16> to vector<8x8xbf16>
    %29 = vector.shape_cast %26 : vector<8x8xbf16> to vector<1x1x8x8xbf16>
    tpu.vector_store %arg4[%c0_26, %c3_27, %c0_28, %c0_29], %29 {strides = array<i32>} : memref<1x12x8x8xbf16, #tpu.memory_space<vmem>>, vector<1x1x8x8xbf16>,
    %c4 = arith.constant 4 : index
    %c0_30 = arith.constant 0 : index
    %c0_31 = arith.constant 0 : index
    %30 = vector.load %arg3[%c4, %c0_30, %c0_31] : memref<12x32x8xbf16, #tpu.memory_space<vmem>>, vector<1x32x8xbf16>
    %31 = vector.shape_cast %30 : vector<1x32x8xbf16> to vector<32x8xbf16>
    %cst_32 = arith.constant dense<0.000000e+00> : vector<8x8xf32>
    %32 = tpu.matmul %1, %31, %cst_32 {dimension_numbers = #tpu.dot_dimension_numbers<[1], [0], [0], [1], [0, 0, 1, 1], [], []>} : vector<8x32xbf16>, vector<32x8xbf16>, vector<8x8xf32> -> vector<8x8xf32>
    %33 = arith.truncf %32 : vector<8x8xf32> to vector<8x8xbf16>
    %c0_33 = arith.constant 0 : index
    %c4_34 = arith.constant 4 : index
    %c0_35 = arith.constant 0 : index
    %c0_36 = arith.constant 0 : index
    %34 = vector.load %arg4[%c0_33, %c4_34, %c0_35, %c0_36] : memref<1x12x8x8xbf16, #tpu.memory_space<vmem>>, vector<1x1x8x8xbf16>
    %35 = vector.shape_cast %34 : vector<1x1x8x8xbf16> to vector<8x8xbf16>
    %36 = vector.shape_cast %33 : vector<8x8xbf16> to vector<1x1x8x8xbf16>
    tpu.vector_store %arg4[%c0_33, %c4_34, %c0_35, %c0_36], %36 {strides = array<i32>} : memref<1x12x8x8xbf16, #tpu.memory_space<vmem>>, vector<1x1x8x8xbf16>,
    %c5 = arith.constant 5 : index
    %c0_37 = arith.constant 0 : index
    %c0_38 = arith.constant 0 : index
    %37 = vector.load %arg3[%c5, %c0_37, %c0_38] : memref<12x32x8xbf16, #tpu.memory_space<vmem>>, vector<1x32x8xbf16>
    %38 = vector.shape_cast %37 : vector<1x32x8xbf16> to vector<32x8xbf16>
    %cst_39 = arith.constant dense<0.000000e+00> : vector<8x8xf32>
    %39 = tpu.matmul %1, %38, %cst_39 {dimension_numbers = #tpu.dot_dimension_numbers<[1], [0], [0], [1], [0, 0, 1, 1], [], []>} : vector<8x32xbf16>, vector<32x8xbf16>, vector<8x8xf32> -> vector<8x8xf32>
    %40 = arith.truncf %39 : vector<8x8xf32> to vector<8x8xbf16>
    %c0_40 = arith.constant 0 : index
    %c5_41 = arith.constant 5 : index
    %c0_42 = arith.constant 0 : index
    %c0_43 = arith.constant 0 : index
    %41 = vector.load %arg4[%c0_40, %c5_41, %c0_42, %c0_43] : memref<1x12x8x8xbf16, #tpu.memory_space<vmem>>, vector<1x1x8x8xbf16>
    %42 = vector.shape_cast %41 : vector<1x1x8x8xbf16> to vector<8x8xbf16>
    %43 = vector.shape_cast %40 : vector<8x8xbf16> to vector<1x1x8x8xbf16>
    tpu.vector_store %arg4[%c0_40, %c5_41, %c0_42, %c0_43], %43 {strides = array<i32>} : memref<1x12x8x8xbf16, #tpu.memory_space<vmem>>, vector<1x1x8x8xbf16>,
    %c6 = arith.constant 6 : index
    %c0_44 = arith.constant 0 : index
    %c0_45 = arith.constant 0 : index
    %44 = vector.load %arg3[%c6, %c0_44, %c0_45] : memref<12x32x8xbf16, #tpu.memory_space<vmem>>, vector<1x32x8xbf16>
    %45 = vector.shape_cast %44 : vector<1x32x8xbf16> to vector<32x8xbf16>
    %cst_46 = arith.constant dense<0.000000e+00> : vector<8x8xf32>
    %46 = tpu.matmul %1, %45, %cst_46 {dimension_numbers = #tpu.dot_dimension_numbers<[1], [0], [0], [1], [0, 0, 1, 1], [], []>} : vector<8x32xbf16>, vector<32x8xbf16>, vector<8x8xf32> -> vector<8x8xf32>
    %47 = arith.truncf %46 : vector<8x8xf32> to vector<8x8xbf16>
    %c0_47 = arith.constant 0 : index
    %c6_48 = arith.constant 6 : index
    %c0_49 = arith.constant 0 : index
    %c0_50 = arith.constant 0 : index
    %48 = vector.load %arg4[%c0_47, %c6_48, %c0_49, %c0_50] : memref<1x12x8x8xbf16, #tpu.memory_space<vmem>>, vector<1x1x8x8xbf16>
    %49 = vector.shape_cast %48 : vector<1x1x8x8xbf16> to vector<8x8xbf16>
    %50 = vector.shape_cast %47 : vector<8x8xbf16> to vector<1x1x8x8xbf16>
    tpu.vector_store %arg4[%c0_47, %c6_48, %c0_49, %c0_50], %50 {strides = array<i32>} : memref<1x12x8x8xbf16, #tpu.memory_space<vmem>>, vector<1x1x8x8xbf16>,
    %c7 = arith.constant 7 : index
    %c0_51 = arith.constant 0 : index
    %c0_52 = arith.constant 0 : index
    %51 = vector.load %arg3[%c7, %c0_51, %c0_52] : memref<12x32x8xbf16, #tpu.memory_space<vmem>>, vector<1x32x8xbf16>
    %52 = vector.shape_cast %51 : vector<1x32x8xbf16> to vector<32x8xbf16>
    %cst_53 = arith.constant dense<0.000000e+00> : vector<8x8xf32>
    %53 = tpu.matmul %1, %52, %cst_53 {dimension_numbers = #tpu.dot_dimension_numbers<[1], [0], [0], [1], [0, 0, 1, 1], [], []>} : vector<8x32xbf16>, vector<32x8xbf16>, vector<8x8xf32> -> vector<8x8xf32>
    %54 = arith.truncf %53 : vector<8x8xf32> to vector<8x8xbf16>
    %c0_54 = arith.constant 0 : index
    %c7_55 = arith.constant 7 : index
    %c0_56 = arith.constant 0 : index
    %c0_57 = arith.constant 0 : index
    %55 = vector.load %arg4[%c0_54, %c7_55, %c0_56, %c0_57] : memref<1x12x8x8xbf16, #tpu.memory_space<vmem>>, vector<1x1x8x8xbf16>
    %56 = vector.shape_cast %55 : vector<1x1x8x8xbf16> to vector<8x8xbf16>
    %57 = vector.shape_cast %54 : vector<8x8xbf16> to vector<1x1x8x8xbf16>
    tpu.vector_store %arg4[%c0_54, %c7_55, %c0_56, %c0_57], %57 {strides = array<i32>} : memref<1x12x8x8xbf16, #tpu.memory_space<vmem>>, vector<1x1x8x8xbf16>,
    %c8 = arith.constant 8 : index
    %c0_58 = arith.constant 0 : index
    %c0_59 = arith.constant 0 : index
    %58 = vector.load %arg3[%c8, %c0_58, %c0_59] : memref<12x32x8xbf16, #tpu.memory_space<vmem>>, vector<1x32x8xbf16>
    %59 = vector.shape_cast %58 : vector<1x32x8xbf16> to vector<32x8xbf16>
    %cst_60 = arith.constant dense<0.000000e+00> : vector<8x8xf32>
    %60 = tpu.matmul %1, %59, %cst_60 {dimension_numbers = #tpu.dot_dimension_numbers<[1], [0], [0], [1], [0, 0, 1, 1], [], []>} : vector<8x32xbf16>, vector<32x8xbf16>, vector<8x8xf32> -> vector<8x8xf32>
    %61 = arith.truncf %60 : vector<8x8xf32> to vector<8x8xbf16>
    %c0_61 = arith.constant 0 : index
    %c8_62 = arith.constant 8 : index
    %c0_63 = arith.constant 0 : index
    %c0_64 = arith.constant 0 : index
    %62 = vector.load %arg4[%c0_61, %c8_62, %c0_63, %c0_64] : memref<1x12x8x8xbf16, #tpu.memory_space<vmem>>, vector<1x1x8x8xbf16>
    %63 = vector.shape_cast %62 : vector<1x1x8x8xbf16> to vector<8x8xbf16>
    %64 = vector.shape_cast %61 : vector<8x8xbf16> to vector<1x1x8x8xbf16>
    tpu.vector_store %arg4[%c0_61, %c8_62, %c0_63, %c0_64], %64 {strides = array<i32>} : memref<1x12x8x8xbf16, #tpu.memory_space<vmem>>, vector<1x1x8x8xbf16>,
    %c9 = arith.constant 9 : index
    %c0_65 = arith.constant 0 : index
    %c0_66 = arith.constant 0 : index
    %65 = vector.load %arg3[%c9, %c0_65, %c0_66] : memref<12x32x8xbf16, #tpu.memory_space<vmem>>, vector<1x32x8xbf16>
    %66 = vector.shape_cast %65 : vector<1x32x8xbf16> to vector<32x8xbf16>
    %cst_67 = arith.constant dense<0.000000e+00> : vector<8x8xf32>
    %67 = tpu.matmul %1, %66, %cst_67 {dimension_numbers = #tpu.dot_dimension_numbers<[1], [0], [0], [1], [0, 0, 1, 1], [], []>} : vector<8x32xbf16>, vector<32x8xbf16>, vector<8x8xf32> -> vector<8x8xf32>
    %68 = arith.truncf %67 : vector<8x8xf32> to vector<8x8xbf16>
    %c0_68 = arith.constant 0 : index
    %c9_69 = arith.constant 9 : index
    %c0_70 = arith.constant 0 : index
    %c0_71 = arith.constant 0 : index
    %69 = vector.load %arg4[%c0_68, %c9_69, %c0_70, %c0_71] : memref<1x12x8x8xbf16, #tpu.memory_space<vmem>>, vector<1x1x8x8xbf16>
    %70 = vector.shape_cast %69 : vector<1x1x8x8xbf16> to vector<8x8xbf16>
    %71 = vector.shape_cast %68 : vector<8x8xbf16> to vector<1x1x8x8xbf16>
    tpu.vector_store %arg4[%c0_68, %c9_69, %c0_70, %c0_71], %71 {strides = array<i32>} : memref<1x12x8x8xbf16, #tpu.memory_space<vmem>>, vector<1x1x8x8xbf16>,
    %c10 = arith.constant 10 : index
    %c0_72 = arith.constant 0 : index
    %c0_73 = arith.constant 0 : index
    %72 = vector.load %arg3[%c10, %c0_72, %c0_73] : memref<12x32x8xbf16, #tpu.memory_space<vmem>>, vector<1x32x8xbf16>
    %73 = vector.shape_cast %72 : vector<1x32x8xbf16> to vector<32x8xbf16>
    %cst_74 = arith.constant dense<0.000000e+00> : vector<8x8xf32>
    %74 = tpu.matmul %1, %73, %cst_74 {dimension_numbers = #tpu.dot_dimension_numbers<[1], [0], [0], [1], [0, 0, 1, 1], [], []>} : vector<8x32xbf16>, vector<32x8xbf16>, vector<8x8xf32> -> vector<8x8xf32>
    %75 = arith.truncf %74 : vector<8x8xf32> to vector<8x8xbf16>
    %c0_75 = arith.constant 0 : index
    %c10_76 = arith.constant 10 : index
    %c0_77 = arith.constant 0 : index
    %c0_78 = arith.constant 0 : index
    %76 = vector.load %arg4[%c0_75, %c10_76, %c0_77, %c0_78] : memref<1x12x8x8xbf16, #tpu.memory_space<vmem>>, vector<1x1x8x8xbf16>
    %77 = vector.shape_cast %76 : vector<1x1x8x8xbf16> to vector<8x8xbf16>
    %78 = vector.shape_cast %75 : vector<8x8xbf16> to vector<1x1x8x8xbf16>
    tpu.vector_store %arg4[%c0_75, %c10_76, %c0_77, %c0_78], %78 {strides = array<i32>} : memref<1x12x8x8xbf16, #tpu.memory_space<vmem>>, vector<1x1x8x8xbf16>,
    %c11 = arith.constant 11 : index
    %c0_79 = arith.constant 0 : index
    %c0_80 = arith.constant 0 : index
    %79 = vector.load %arg3[%c11, %c0_79, %c0_80] : memref<12x32x8xbf16, #tpu.memory_space<vmem>>, vector<1x32x8xbf16>
    %80 = vector.shape_cast %79 : vector<1x32x8xbf16> to vector<32x8xbf16>
    %cst_81 = arith.constant dense<0.000000e+00> : vector<8x8xf32>
    %81 = tpu.matmul %1, %80, %cst_81 {dimension_numbers = #tpu.dot_dimension_numbers<[1], [0], [0], [1], [0, 0, 1, 1], [], []>} : vector<8x32xbf16>, vector<32x8xbf16>, vector<8x8xf32> -> vector<8x8xf32>
    %82 = arith.truncf %81 : vector<8x8xf32> to vector<8x8xbf16>
    %c0_82 = arith.constant 0 : index
    %c11_83 = arith.constant 11 : index
    %c0_84 = arith.constant 0 : index
    %c0_85 = arith.constant 0 : index
    %83 = vector.load %arg4[%c0_82, %c11_83, %c0_84, %c0_85] : memref<1x12x8x8xbf16, #tpu.memory_space<vmem>>, vector<1x1x8x8xbf16>
    %84 = vector.shape_cast %83 : vector<1x1x8x8xbf16> to vector<8x8xbf16>
    %85 = vector.shape_cast %82 : vector<8x8xbf16> to vector<1x1x8x8xbf16>
    tpu.vector_store %arg4[%c0_82, %c11_83, %c0_84, %c0_85], %85 {strides = array<i32>} : memref<1x12x8x8xbf16, #tpu.memory_space<vmem>>, vector<1x1x8x8xbf16>,
    return
  }
  func.func @transform_0(%arg0: i32, %arg1: i32) -> (i32, i32, i32) {
    %c0_i32 = arith.constant 0 : i32
    %c0_i32_0 = arith.constant 0 : i32
    return %arg0, %arg1, %c0_i32 : i32, i32, i32
  }
  func.func @transform_1(%arg0: i32, %arg1: i32) -> (i32, i32, i32) {
    %c0_i32 = arith.constant 0 : i32
    %c0_i32_0 = arith.constant 0 : i32
    %c0_i32_1 = arith.constant 0 : i32
    %c0_i32_2 = arith.constant 0 : i32
    return %c0_i32, %c0_i32_0, %c0_i32_1 : i32, i32, i32
  }
  func.func @transform_2(%arg0: i32, %arg1: i32) -> (i32, i32, i32, i32) {
    %c0_i32 = arith.constant 0 : i32
    %c0_i32_0 = arith.constant 0 : i32
    %c0_i32_1 = arith.constant 0 : i32
    return %arg0, %c0_i32, %arg1, %c0_i32_0 : i32, i32, i32, i32
  }
}

</mosaic_0001>

<llo_original>
// kernel: tpu_custom_call.1
$region0: #{tpu_custom_call.1}
  #allocation0 [shape = 'u32[]', space=smem, size = 0x4, offset = 0x4, fixed_abs, tag = 'smem constant byte address 0x4 - core index']
  #allocation1 [shape = 'u32[144,128]{1,0:T(1,128)}', space=vmem, size = 0x12000, scoped, tag = 'internal scratch']
  %s0 = inlined_call_operand.vmem [shape: bf16[2,8,32], index: 0, kind: input, shape index: {}]
  %s1 = inlined_call_operand.vmem [shape: bf16[12,32,8], index: 1, kind: input, shape index: {}]
  %s2 = inlined_call_operand.vmem [shape: bf16[2,12,8,8], index: 2, kind: output, shape index: {}]
  %s3 = sld [smem:[#allocation0]]
  $region41: #{tpu_custom_call.1} parent=0
    _
  %s5 = ssub.s32 1, %s3
  %s6 = scalar_select 0, %s5, %s3
  loop: start=0, step=1, limit=4
  $region2: #{tpu_custom_call.1} parent=0 // loop_pre_header
    _
  $region3: #{tpu_custom_call.1} parent=0 // loop_header
    %s8 = sphi 0, %s12
    %p9 = scmp.ge.s32.totalorder %s8, 4
    %s15 = sphi 0, %s27
    %s16 = sphi 0, %s23
    %s17 = sphi 0, %s15
    %s18 = sphi 0, %s16
    %s19 = sphi 0, %s17
    %s20 = sphi 0, %s18
    %s32 = sphi 0, %s34
    %s35 = sphi 0, %s32
    %s36 = sphi 0, %s35
    %s52 = sphi 0, %s36
    %s56 = sphi 0, %s56
    %s58 = sphi 0, %s56
    %s59 = sphi 0, %s58
    %s73 = sphi 0, %s59
    %s81 = sphi 0, %s83
    %s84 = sphi 0, %s81
    %s85 = sphi 0, %s84
    %s101 = sphi 0, %s85
  $region4: #{tpu_custom_call.1} parent=0 // loop_header_branch
    %11 = sbr.rel (%p9) target = $region8
  $region5: #{tpu_custom_call.1} parent=0 // loop_body
    %s13 = ssub.s32 %s8, 1
    %s14 = ssub.s32 %s8, 2
    %s21 = sadd.s32 1, %s16
    %p22 = scmp.ge.s32.totalorder %s21, 1
    %s23 = scalar_select %p22, 0, %s21
    %s24 = sadd.s32 1, %s15
    %s25 = scalar_select %p22, %s24, %s15
    %p26 = scmp.ge.s32.totalorder %s25, 2
    %s27 = scalar_select %p26, 0, %s25
    %s28 = ssub.s32 %s15, %s27
    %s29 = ssub.s32 %s16, %s23
    %s30 = sor.u32 %s28, %s29
    %p31 = scmp.eq.s32.totalorder %s30, 0
    %s33 = sadd.s32 %s32, 1
    %s34 = scalar_select %p31, %s32, %s33
    %p37 = pneg %p31
    %p38 = scmp.eq.s32.totalorder %s8, 1
    %p39 = por %p37, %p38
    %p40 = scmp.ne.s32.totalorder %s32, %s35
    %p41 = scmp.eq.s32.totalorder %s8, 0
    %p42 = por %p40, %p41
    %p43 = scmp.ne.s32.totalorder %s32, %s35
    %p44 = scmp.eq.s32.totalorder %s13, 1
    %p45 = por %p43, %p44
    %p46 = scmp.ne.s32.totalorder %s35, %s36
    %p47 = scmp.eq.s32.totalorder %s13, 0
    %p48 = por %p46, %p47
    %p49 = scmp.ne.s32.totalorder %s35, %s36
    %p50 = scmp.eq.s32.totalorder %s14, 1
    %p51 = por %p49, %p50
    %p53 = scmp.ne.s32.totalorder %s36, %s52
    %p54 = scmp.eq.s32.totalorder %s14, 0
    %p55 = por %p53, %p54
    %s57 = sadd.s32 %s56, 1
    %p60 = scmp.eq.s32.totalorder %s8, 1
    %p61 = scmp.ne.s32.totalorder %s56, %s58
    %p62 = scmp.eq.s32.totalorder %s8, 0
    %p63 = por %p61, %p62
    %p64 = scmp.ne.s32.totalorder %s56, %s58
    %p65 = scmp.eq.s32.totalorder %s13, 1
    %p66 = por %p64, %p65
    %p67 = scmp.ne.s32.totalorder %s58, %s59
    %p68 = scmp.eq.s32.totalorder %s13, 0
    %p69 = por %p67, %p68
    %p70 = scmp.ne.s32.totalorder %s58, %s59
    %p71 = scmp.eq.s32.totalorder %s14, 1
    %p72 = por %p70, %p71
    %p74 = scmp.ne.s32.totalorder %s59, %s73
    %p75 = scmp.eq.s32.totalorder %s14, 0
    %p76 = por %p74, %p75
    %s77 = ssub.s32 %s15, %s27
    %s78 = ssub.s32 %s16, %s23
    %s79 = sor.u32 %s77, %s78
    %p80 = scmp.eq.s32.totalorder %s79, 0
    %s82 = sadd.s32 %s81, 1
    %s83 = scalar_select %p80, %s81, %s82
    %p86 = pneg %p80
    %p87 = scmp.eq.s32.totalorder %s8, 1
    %p88 = por %p86, %p87
    %p89 = scmp.ne.s32.totalorder %s81, %s84
    %p90 = scmp.eq.s32.totalorder %s8, 0
    %p91 = por %p89, %p90
    %p92 = scmp.ne.s32.totalorder %s81, %s84
    %p93 = scmp.eq.s32.totalorder %s13, 1
    %p94 = por %p92, %p93
    %p95 = scmp.ne.s32.totalorder %s84, %s85
    %p96 = scmp.eq.s32.totalorder %s13, 0
    %p97 = por %p95, %p96
    %p98 = scmp.ne.s32.totalorder %s84, %s85
    %p99 = scmp.eq.s32.totalorder %s14, 1
    %p100 = por %p98, %p99
    %p102 = scmp.ne.s32.totalorder %s85, %s101
    %p103 = scmp.eq.s32.totalorder %s14, 0
    %p104 = por %p102, %p103
    %p105 = scmp.le.s32.totalorder 1, %s8
    %p106 = scmp.lt.s32.totalorder %s8, 3
    %p107 = pnand %p105, %p106
    %p108 = pneg %p107
    // Predicated region
    $region9: #{tpu_custom_call.1} parent=5 // pred_check
      _
    $region10: #{tpu_custom_call.1} parent=5 // pred_check_branch
      %110 = sbr.rel (%p107) target = $region12
    $region11: #{tpu_custom_call.1} parent=5 // pred_region
      %s111 = ssub.s32 %s8, 1
      // Predicated region
      $region13: #{tpu_custom_call.1} parent=11 // pred_check
        %p112 = pneg %p69
      $region14: #{tpu_custom_call.1} parent=11 // pred_check_branch
        %114 = sbr.rel (%p112) target = $region16
      $region15: #{tpu_custom_call.1} parent=11 // pred_region
        _
      $region16: #{tpu_custom_call.1} parent=11 // pred_fallthru
        _
    $region12: #{tpu_custom_call.1} parent=5 // pred_fallthru
      _
    %p115 = scmp.lt.s32.totalorder %s8, 2
    // Predicated region
    $region17: #{tpu_custom_call.1} parent=5 // pred_check
      %p116 = pneg %p115
    $region18: #{tpu_custom_call.1} parent=5 // pred_check_branch
      %118 = sbr.rel (%p116) target = $region20
    $region19: #{tpu_custom_call.1} parent=5 // pred_region
      // Predicated region
      $region21: #{tpu_custom_call.1} parent=19 // pred_check
        %p119 = pneg %p42
      $region22: #{tpu_custom_call.1} parent=19 // pred_check_branch
        %121 = sbr.rel (%p119) target = $region24
      $region23: #{tpu_custom_call.1} parent=19 // pred_region
        %p122 = scmp.lt.s32.totalorder %s15, 1
        %s123 = scalar_select %p122, %s15, 1
        %p124 = scmp.lt.s32.totalorder %s16, 0
        %s125 = scalar_select %p124, %s16, 0
        %s126 = sadd.s32 %s125, %s123
        %s127 = smul.addr %s126, 4
        %s128 = scalar_lea.vmem %s0, %s127
      $region24: #{tpu_custom_call.1} parent=19 // pred_fallthru
        _
    $region20: #{tpu_custom_call.1} parent=5 // pred_fallthru
      _
    %p129 = scmp.le.s32.totalorder 1, %s8
    %p130 = scmp.lt.s32.totalorder %s8, 3
    %p131 = pnand %p129, %p130
    %p132 = pneg %p131
    // Predicated region
    $region25: #{tpu_custom_call.1} parent=5 // pred_check
      _
    $region26: #{tpu_custom_call.1} parent=5 // pred_check_branch
      %134 = sbr.rel (%p131) target = $region28
    $region27: #{tpu_custom_call.1} parent=5 // pred_region
      %s135 = ssub.s32 %s8, 1
      %p136 = scmp.lt.s32.totalorder %s17, 1
      %s137 = scalar_select %p136, %s17, 1
      %p138 = scmp.lt.s32.totalorder %s18, 0
      %s139 = scalar_select %p138, %s18, 0
      %s140 = sadd.s32 %s139, %s137
      %s141 = smul.addr %s140, 4
      %s142 = scalar_lea.vmem %s0, %s141
      %p143 = pneg %p48
      %p144 = pneg %p45
      %p145 = pneg %p69
      %p146 = pneg %p66
      %p147 = pneg %p97
      %p148 = pneg %p94
      %p149 = scmp.lt.s32.totalorder %s17, 1
      %s150 = scalar_select %p149, %s17, 1
      %p151 = scmp.lt.s32.totalorder %s18, 0
      %s152 = scalar_select %p151, %s18, 0
      %s153 = smul.addr %s150, 12
      %s154 = sadd.s32 %s152, %s153
      %s155 = smul.addr %s154, 4
      %s156 = scalar_lea.vmem %s2, %s155
      %p157 = scmp.lt.s32.totalorder %s17, 1
      %s158 = scalar_select %p157, %s17, 1
      %p159 = scmp.lt.s32.totalorder %s18, 0
      %s160 = scalar_select %p159, %s18, 0
      %s161 = sadd.s32 %s160, %s158
      %s162 = smul.addr %s161, 4
      %s163 = scalar_lea.vmem %s0, %s162
      %p164 = scmp.lt.s32.totalorder %s17, 1
      %s165 = scalar_select %p164, %s17, 1
      %p166 = scmp.lt.s32.totalorder %s18, 0
      %s167 = scalar_select %p166, %s18, 0
      %s168 = smul.addr %s165, 12
      %s169 = sadd.s32 %s167, %s168
      %s170 = smul.addr %s169, 4
      %s171 = scalar_lea.vmem %s2, %s170
      %v173 = vld [vmem:[%s163] sm:$0xf]
      %v174 = vld [vmem:[%s1] sm:$0xf]
      %v175 = vld [vmem:[%s1 + $0x4] sm:$0xf]
      %v176 = vld [vmem:[%s1 + $0x8] sm:$0xf]
      %v177 = vld [vmem:[%s1 + $0xc] sm:$0xf]
      %v182 = vunpack.c.l.b16 %v174
      %v183 = vunpack.c.l.b16 %v175
      %v184 = vunpack.c.l.b16 %v176
      %v185 = vunpack.c.l.b16 %v177
      %v186 = vpack.c.b16 %v183, %v182
      %v187 = vpack.c.b16 %v185, %v184
      %vm190 = vcmask 261120
      %v192 = vsel %vm190, %v173, 0
      %194 = vmatprep.subr.bf16.mxu0 0
      %195 = vmatpush1.bf16.msra.mxu0 %v186
      %196 = vmatprep.subr.bf16.mxu0 0
      %197 = vmatpush1.bf16.msra.mxu0 %v187
      %198 = vmatprep.subr.bf16.mxu0 0
      %199 = vmatpush1.bf16.msra.mxu0 0
      %200 = vmatprep.subr.bf16.mxu0 0
      %201 = vmatpush1.bf16.msra.mxu0 0
      %202 = vmatprep.subr.bf16.mxu0 0
      %203 = vmatpush1.bf16.msra.mxu0 0
      %204 = vmatprep.subr.bf16.mxu0 0
      %205 = vmatpush1.bf16.msra.mxu0 0
      %206 = vmatprep.subr.bf16.mxu0 0
      %207 = vmatpush1.bf16.msra.mxu0 0
      %208 = vmatprep.subr.bf16.mxu0 0
      %209 = vmatpush1.bf16.msra.mxu0 0
      %210 = vmatprep.subr.bf16.mxu0 0
      %211 = vmatpush1.bf16.msra.mxu0 0
      %212 = vmatprep.subr.bf16.mxu0 0
      %213 = vmatpush1.bf16.msra.mxu0 0
      %214 = vmatprep.subr.bf16.mxu0 0
      %215 = vmatpush1.bf16.msra.mxu0 0
      %216 = vmatprep.subr.bf16.mxu0 0
      %217 = vmatpush1.bf16.msra.mxu0 0
      %218 = vmatprep.subr.bf16.mxu0 0
      %219 = vmatpush1.bf16.msra.mxu0 0
      %220 = vmatprep.subr.bf16.mxu0 0
      %221 = vmatpush1.bf16.msra.mxu0 0
      %222 = vmatprep.subr.bf16.mxu0 0
      %223 = vmatpush1.bf16.msra.mxu0 0
      %224 = vmatprep.subr.bf16.mxu0 0
      %225 = vmatpush1.bf16.msra.mxu0 0
      %226 = vmatprep.mubr.bf16.mxu0 0
      %227 = vmatmul.mubr.bf16.gmra.mrb[0].mxu0 %v192
      %v228 = vpop.f32.mrb[0].mxu0
      %v229 = vadd.f32 0.0, %v228
      %v230 = vpop.f32.mrb[0].mxu0
      %v231 = vpop.f32.mrb[0].mxu0
      %v232 = vpop.f32.mrb[0].mxu0
      %233 = vdwg.mxu0
      %v234 = vpack.c.bf16 %v229, %v229
      %vm235 = vcmask 60416
      %236 = vst.msk [vmem:[%s171] sm:$0xf] %vm235, %v234
      %s237 = scalar_lea.vmem %s1, 16
      %v238 = vld [vmem:[%s237] sm:$0xf]
      %v239 = vld [vmem:[%s237 + $0x4] sm:$0xf]
      %v240 = vld [vmem:[%s237 + $0x8] sm:$0xf]
      %v241 = vld [vmem:[%s237 + $0xc] sm:$0xf]
      %v246 = vunpack.c.l.b16 %v238
      %v247 = vunpack.c.l.b16 %v239
      %v248 = vunpack.c.l.b16 %v240
      %v249 = vunpack.c.l.b16 %v241
      %v250 = vpack.c.b16 %v247, %v246
      %v251 = vpack.c.b16 %v249, %v248
      %254 = vmatprep.subr.bf16.mxu0 0
      %255 = vmatpush1.bf16.msra.mxu0 %v250
      %256 = vmatprep.subr.bf16.mxu0 0
      %257 = vmatpush1.bf16.msra.mxu0 %v251
      %258 = vmatprep.subr.bf16.mxu0 0
      %259 = vmatpush1.bf16.msra.mxu0 0
      %260 = vmatprep.subr.bf16.mxu0 0
      %261 = vmatpush1.bf16.msra.mxu0 0
      %262 = vmatprep.subr.bf16.mxu0 0
      %263 = vmatpush1.bf16.msra.mxu0 0
      %264 = vmatprep.subr.bf16.mxu0 0
      %265 = vmatpush1.bf16.msra.mxu0 0
      %266 = vmatprep.subr.bf16.mxu0 0
      %267 = vmatpush1.bf16.msra.mxu0 0
      %268 = vmatprep.subr.bf16.mxu0 0
      %269 = vmatpush1.bf16.msra.mxu0 0
      %270 = vmatprep.subr.bf16.mxu0 0
      %271 = vmatpush1.bf16.msra.mxu0 0
      %272 = vmatprep.subr.bf16.mxu0 0
      %273 = vmatpush1.bf16.msra.mxu0 0
      %274 = vmatprep.subr.bf16.mxu0 0
      %275 = vmatpush1.bf16.msra.mxu0 0
      %276 = vmatprep.subr.bf16.mxu0 0
      %277 = vmatpush1.bf16.msra.mxu0 0
      %278 = vmatprep.subr.bf16.mxu0 0
      %279 = vmatpush1.bf16.msra.mxu0 0
      %280 = vmatprep.subr.bf16.mxu0 0
      %281 = vmatpush1.bf16.msra.mxu0 0
      %282 = vmatprep.subr.bf16.mxu0 0
      %283 = vmatpush1.bf16.msra.mxu0 0
      %284 = vmatprep.subr.bf16.mxu0 0
      %285 = vmatpush1.bf16.msra.mxu0 0
      %286 = vmatprep.mubr.bf16.mxu0 0
      %287 = vmatmul.mubr.bf16.gmra.mrb[0].mxu0 %v192
      %v288 = vpop.f32.mrb[0].mxu0
      %v289 = vadd.f32 0.0, %v288
      %v290 = vpop.f32.mrb[0].mxu0
      %v291 = vpop.f32.mrb[0].mxu0
      %v292 = vpop.f32.mrb[0].mxu0
      %293 = vdwg.mxu0
      %v294 = vpack.c.bf16 %v289, %v289
      %s295 = scalar_lea.vmem %s171, 4
      %296 = vst.msk [vmem:[%s295] sm:$0xf] %vm235, %v294
      %s297 = scalar_lea.vmem %s1, 32
      %v298 = vld [vmem:[%s297] sm:$0xf]
      %v299 = vld [vmem:[%s297 + $0x4] sm:$0xf]
      %v300 = vld [vmem:[%s297 + $0x8] sm:$0xf]
      %v301 = vld [vmem:[%s297 + $0xc] sm:$0xf]
      %v306 = vunpack.c.l.b16 %v298
      %v307 = vunpack.c.l.b16 %v299
      %v308 = vunpack.c.l.b16 %v300
      %v309 = vunpack.c.l.b16 %v301
      %v310 = vpack.c.b16 %v307, %v306
      %v311 = vpack.c.b16 %v309, %v308
      %314 = vmatprep.subr.bf16.mxu0 0
      %315 = vmatpush1.bf16.msra.mxu0 %v310
      %316 = vmatprep.subr.bf16.mxu0 0
      %317 = vmatpush1.bf16.msra.mxu0 %v311
      %318 = vmatprep.subr.bf16.mxu0 0
      %319 = vmatpush1.bf16.msra.mxu0 0
      %320 = vmatprep.subr.bf16.mxu0 0
      %321 = vmatpush1.bf16.msra.mxu0 0
      %322 = vmatprep.subr.bf16.mxu0 0
      %323 = vmatpush1.bf16.msra.mxu0 0
      %324 = vmatprep.subr.bf16.mxu0 0
      %325 = vmatpush1.bf16.msra.mxu0 0
      %326 = vmatprep.subr.bf16.mxu0 0
      %327 = vmatpush1.bf16.msra.mxu0 0
      %328 = vmatprep.subr.bf16.mxu0 0
      %329 = vmatpush1.bf16.msra.mxu0 0
      %330 = vmatprep.subr.bf16.mxu0 0
      %331 = vmatpush1.bf16.msra.mxu0 0
      %332 = vmatprep.subr.bf16.mxu0 0
      %333 = vmatpush1.bf16.msra.mxu0 0
      %334 = vmatprep.subr.bf16.mxu0 0
      %335 = vmatpush1.bf16.msra.mxu0 0
      %336 = vmatprep.subr.bf16.mxu0 0
      %337 = vmatpush1.bf16.msra.mxu0 0
      %338 = vmatprep.subr.bf16.mxu0 0
      %339 = vmatpush1.bf16.msra.mxu0 0
      %340 = vmatprep.subr.bf16.mxu0 0
      %341 = vmatpush1.bf16.msra.mxu0 0
      %342 = vmatprep.subr.bf16.mxu0 0
      %343 = vmatpush1.bf16.msra.mxu0 0
      %344 = vmatprep.subr.bf16.mxu0 0
      %345 = vmatpush1.bf16.msra.mxu0 0
      %346 = vmatprep.mubr.bf16.mxu0 0
      %347 = vmatmul.mubr.bf16.gmra.mrb[0].mxu0 %v192
      %v348 = vpop.f32.mrb[0].mxu0
      %v349 = vadd.f32 0.0, %v348
      %v350 = vpop.f32.mrb[0].mxu0
      %v351 = vpop.f32.mrb[0].mxu0
      %v352 = vpop.f32.mrb[0].mxu0
      %353 = vdwg.mxu0
      %v354 = vpack.c.bf16 %v349, %v349
      %s355 = scalar_lea.vmem %s171, 8
      %356 = vst.msk [vmem:[%s355] sm:$0xf] %vm235, %v354
      %s357 = scalar_lea.vmem %s1, 48
      %v358 = vld [vmem:[%s357] sm:$0xf]
      %v359 = vld [vmem:[%s357 + $0x4] sm:$0xf]
      %v360 = vld [vmem:[%s357 + $0x8] sm:$0xf]
      %v361 = vld [vmem:[%s357 + $0xc] sm:$0xf]
      %v366 = vunpack.c.l.b16 %v358
      %v367 = vunpack.c.l.b16 %v359
      %v368 = vunpack.c.l.b16 %v360
      %v369 = vunpack.c.l.b16 %v361
      %v370 = vpack.c.b16 %v367, %v366
      %v371 = vpack.c.b16 %v369, %v368
      %374 = vmatprep.subr.bf16.mxu0 0
      %375 = vmatpush1.bf16.msra.mxu0 %v370
      %376 = vmatprep.subr.bf16.mxu0 0
      %377 = vmatpush1.bf16.msra.mxu0 %v371
      %378 = vmatprep.subr.bf16.mxu0 0
      %379 = vmatpush1.bf16.msra.mxu0 0
      %380 = vmatprep.subr.bf16.mxu0 0
      %381 = vmatpush1.bf16.msra.mxu0 0
      %382 = vmatprep.subr.bf16.mxu0 0
      %383 = vmatpush1.bf16.msra.mxu0 0
      %384 = vmatprep.subr.bf16.mxu0 0
      %385 = vmatpush1.bf16.msra.mxu0 0
      %386 = vmatprep.subr.bf16.mxu0 0
      %387 = vmatpush1.bf16.msra.mxu0 0
      %388 = vmatprep.subr.bf16.mxu0 0
      %389 = vmatpush1.bf16.msra.mxu0 0
      %390 = vmatprep.subr.bf16.mxu0 0
      %391 = vmatpush1.bf16.msra.mxu0 0
      %392 = vmatprep.subr.bf16.mxu0 0
      %393 = vmatpush1.bf16.msra.mxu0 0
      %394 = vmatprep.subr.bf16.mxu0 0
      %395 = vmatpush1.bf16.msra.mxu0 0
      %396 = vmatprep.subr.bf16.mxu0 0
      %397 = vmatpush1.bf16.msra.mxu0 0
      %398 = vmatprep.subr.bf16.mxu0 0
      %399 = vmatpush1.bf16.msra.mxu0 0
      %400 = vmatprep.subr.bf16.mxu0 0
      %401 = vmatpush1.bf16.msra.mxu0 0
      %402 = vmatprep.subr.bf16.mxu0 0
      %403 = vmatpush1.bf16.msra.mxu0 0
      %404 = vmatprep.subr.bf16.mxu0 0
      %405 = vmatpush1.bf16.msra.mxu0 0
      %406 = vmatprep.mubr.bf16.mxu0 0
      %407 = vmatmul.mubr.bf16.gmra.mrb[0].mxu0 %v192
      %v408 = vpop.f32.mrb[0].mxu0
      %v409 = vadd.f32 0.0, %v408
      %v410 = vpop.f32.mrb[0].mxu0
      %v411 = vpop.f32.mrb[0].mxu0
      %v412 = vpop.f32.mrb[0].mxu0
      %413 = vdwg.mxu0
      %v414 = vpack.c.bf16 %v409, %v409
      %s415 = scalar_lea.vmem %s171, 12
      %416 = vst.msk [vmem:[%s415] sm:$0xf] %vm235, %v414
      %s417 = scalar_lea.vmem %s1, 64
      %v418 = vld [vmem:[%s417] sm:$0xf]
      %v419 = vld [vmem:[%s417 + $0x4] sm:$0xf]
      %v420 = vld [vmem:[%s417 + $0x8] sm:$0xf]
      %v421 = vld [vmem:[%s417 + $0xc] sm:$0xf]
      %v426 = vunpack.c.l.b16 %v418
      %v427 = vunpack.c.l.b16 %v419
      %v428 = vunpack.c.l.b16 %v420
      %v429 = vunpack.c.l.b16 %v421
      %v430 = vpack.c.b16 %v427, %v426
      %v431 = vpack.c.b16 %v429, %v428
      %434 = vmatprep.subr.bf16.mxu0 0
      %435 = vmatpush1.bf16.msra.mxu0 %v430
      %436 = vmatprep.subr.bf16.mxu0 0
      %437 = vmatpush1.bf16.msra.mxu0 %v431
      %438 = vmatprep.subr.bf16.mxu0 0
      %439 = vmatpush1.bf16.msra.mxu0 0
      %440 = vmatprep.subr.bf16.mxu0 0
      %441 = vmatpush1.bf16.msra.mxu0 0
      %442 = vmatprep.subr.bf16.mxu0 0
      %443 = vmatpush1.bf16.msra.mxu0 0
      %444 = vmatprep.subr.bf16.mxu0 0
      %445 = vmatpush1.bf16.msra.mxu0 0
      %446 = vmatprep.subr.bf16.mxu0 0
      %447 = vmatpush1.bf16.msra.mxu0 0
      %448 = vmatprep.subr.bf16.mxu0 0
      %449 = vmatpush1.bf16.msra.mxu0 0
      %450 = vmatprep.subr.bf16.mxu0 0
      %451 = vmatpush1.bf16.msra.mxu0 0
      %452 = vmatprep.subr.bf16.mxu0 0
      %453 = vmatpush1.bf16.msra.mxu0 0
      %454 = vmatprep.subr.bf16.mxu0 0
      %455 = vmatpush1.bf16.msra.mxu0 0
      %456 = vmatprep.subr.bf16.mxu0 0
      %457 = vmatpush1.bf16.msra.mxu0 0
      %458 = vmatprep.subr.bf16.mxu0 0
      %459 = vmatpush1.bf16.msra.mxu0 0
      %460 = vmatprep.subr.bf16.mxu0 0
      %461 = vmatpush1.bf16.msra.mxu0 0
      %462 = vmatprep.subr.bf16.mxu0 0
      %463 = vmatpush1.bf16.msra.mxu0 0
      %464 = vmatprep.subr.bf16.mxu0 0
      %465 = vmatpush1.bf16.msra.mxu0 0
      %466 = vmatprep.mubr.bf16.mxu0 0
      %467 = vmatmul.mubr.bf16.gmra.mrb[0].mxu0 %v192
      %v468 = vpop.f32.mrb[0].mxu0
      %v469 = vadd.f32 0.0, %v468
      %v470 = vpop.f32.mrb[0].mxu0
      %v471 = vpop.f32.mrb[0].mxu0
      %v472 = vpop.f32.mrb[0].mxu0
      %473 = vdwg.mxu0
      %v474 = vpack.c.bf16 %v469, %v469
      %s475 = scalar_lea.vmem %s171, 16
      %476 = vst.msk [vmem:[%s475] sm:$0xf] %vm235, %v474
      %s477 = scalar_lea.vmem %s1, 80
      %v478 = vld [vmem:[%s477] sm:$0xf]
      %v479 = vld [vmem:[%s477 + $0x4] sm:$0xf]
      %v480 = vld [vmem:[%s477 + $0x8] sm:$0xf]
      %v481 = vld [vmem:[%s477 + $0xc] sm:$0xf]
      %v486 = vunpack.c.l.b16 %v478
      %v487 = vunpack.c.l.b16 %v479
      %v488 = vunpack.c.l.b16 %v480
      %v489 = vunpack.c.l.b16 %v481
      %v490 = vpack.c.b16 %v487, %v486
      %v491 = vpack.c.b16 %v489, %v488
      %494 = vmatprep.subr.bf16.mxu0 0
      %495 = vmatpush1.bf16.msra.mxu0 %v490
      %496 = vmatprep.subr.bf16.mxu0 0
      %497 = vmatpush1.bf16.msra.mxu0 %v491
      %498 = vmatprep.subr.bf16.mxu0 0
      %499 = vmatpush1.bf16.msra.mxu0 0
      %500 = vmatprep.subr.bf16.mxu0 0
      %501 = vmatpush1.bf16.msra.mxu0 0
      %502 = vmatprep.subr.bf16.mxu0 0
      %503 = vmatpush1.bf16.msra.mxu0 0
      %504 = vmatprep.subr.bf16.mxu0 0
      %505 = vmatpush1.bf16.msra.mxu0 0
      %506 = vmatprep.subr.bf16.mxu0 0
      %507 = vmatpush1.bf16.msra.mxu0 0
      %508 = vmatprep.subr.bf16.mxu0 0
      %509 = vmatpush1.bf16.msra.mxu0 0
      %510 = vmatprep.subr.bf16.mxu0 0
      %511 = vmatpush1.bf16.msra.mxu0 0
      %512 = vmatprep.subr.bf16.mxu0 0
      %513 = vmatpush1.bf16.msra.mxu0 0
      %514 = vmatprep.subr.bf16.mxu0 0
      %515 = vmatpush1.bf16.msra.mxu0 0
      %516 = vmatprep.subr.bf16.mxu0 0
      %517 = vmatpush1.bf16.msra.mxu0 0
      %518 = vmatprep.subr.bf16.mxu0 0
      %519 = vmatpush1.bf16.msra.mxu0 0
      %520 = vmatprep.subr.bf16.mxu0 0
      %521 = vmatpush1.bf16.msra.mxu0 0
      %522 = vmatprep.subr.bf16.mxu0 0
      %523 = vmatpush1.bf16.msra.mxu0 0
      %524 = vmatprep.subr.bf16.mxu0 0
      %525 = vmatpush1.bf16.msra.mxu0 0
      %526 = vmatprep.mubr.bf16.mxu0 0
      %527 = vmatmul.mubr.bf16.gmra.mrb[0].mxu0 %v192
      %v528 = vpop.f32.mrb[0].mxu0
      %v529 = vadd.f32 0.0, %v528
      %v530 = vpop.f32.mrb[0].mxu0
      %v531 = vpop.f32.mrb[0].mxu0
      %v532 = vpop.f32.mrb[0].mxu0
      %533 = vdwg.mxu0
      %v534 = vpack.c.bf16 %v529, %v529
      %s535 = scalar_lea.vmem %s171, 20
      %536 = vst.msk [vmem:[%s535] sm:$0xf] %vm235, %v534
      %s537 = scalar_lea.vmem %s1, 96
      %v538 = vld [vmem:[%s537] sm:$0xf]
      %v539 = vld [vmem:[%s537 + $0x4] sm:$0xf]
      %v540 = vld [vmem:[%s537 + $0x8] sm:$0xf]
      %v541 = vld [vmem:[%s537 + $0xc] sm:$0xf]
      %v546 = vunpack.c.l.b16 %v538
      %v547 = vunpack.c.l.b16 %v539
      %v548 = vunpack.c.l.b16 %v540
      %v549 = vunpack.c.l.b16 %v541
      %v550 = vpack.c.b16 %v547, %v546
      %v551 = vpack.c.b16 %v549, %v548
      %554 = vmatprep.subr.bf16.mxu0 0
      %555 = vmatpush1.bf16.msra.mxu0 %v550
      %556 = vmatprep.subr.bf16.mxu0 0
      %557 = vmatpush1.bf16.msra.mxu0 %v551
      %558 = vmatprep.subr.bf16.mxu0 0
      %559 = vmatpush1.bf16.msra.mxu0 0
      %560 = vmatprep.subr.bf16.mxu0 0
      %561 = vmatpush1.bf16.msra.mxu0 0
      %562 = vmatprep.subr.bf16.mxu0 0
      %563 = vmatpush1.bf16.msra.mxu0 0
      %564 = vmatprep.subr.bf16.mxu0 0
      %565 = vmatpush1.bf16.msra.mxu0 0
      %566 = vmatprep.subr.bf16.mxu0 0
      %567 = vmatpush1.bf16.msra.mxu0 0
      %568 = vmatprep.subr.bf16.mxu0 0
      %569 = vmatpush1.bf16.msra.mxu0 0
      %570 = vmatprep.subr.bf16.mxu0 0
      %571 = vmatpush1.bf16.msra.mxu0 0
      %572 = vmatprep.subr.bf16.mxu0 0
      %573 = vmatpush1.bf16.msra.mxu0 0
      %574 = vmatprep.subr.bf16.mxu0 0
      %575 = vmatpush1.bf16.msra.mxu0 0
      %576 = vmatprep.subr.bf16.mxu0 0
      %577 = vmatpush1.bf16.msra.mxu0 0
      %578 = vmatprep.subr.bf16.mxu0 0
      %579 = vmatpush1.bf16.msra.mxu0 0
      %580 = vmatprep.subr.bf16.mxu0 0
      %581 = vmatpush1.bf16.msra.mxu0 0
      %582 = vmatprep.subr.bf16.mxu0 0
      %583 = vmatpush1.bf16.msra.mxu0 0
      %584 = vmatprep.subr.bf16.mxu0 0
      %585 = vmatpush1.bf16.msra.mxu0 0
      %586 = vmatprep.mubr.bf16.mxu0 0
      %587 = vmatmul.mubr.bf16.gmra.mrb[0].mxu0 %v192
      %v588 = vpop.f32.mrb[0].mxu0
      %v589 = vadd.f32 0.0, %v588
      %v590 = vpop.f32.mrb[0].mxu0
      %v591 = vpop.f32.mrb[0].mxu0
      %v592 = vpop.f32.mrb[0].mxu0
      %593 = vdwg.mxu0
      %v594 = vpack.c.bf16 %v589, %v589
      %s595 = scalar_lea.vmem %s171, 24
      %596 = vst.msk [vmem:[%s595] sm:$0xf] %vm235, %v594
      %s597 = scalar_lea.vmem %s1, 112
      %v598 = vld [vmem:[%s597] sm:$0xf]
      %v599 = vld [vmem:[%s597 + $0x4] sm:$0xf]
      %v600 = vld [vmem:[%s597 + $0x8] sm:$0xf]
      %v601 = vld [vmem:[%s597 + $0xc] sm:$0xf]
      %v606 = vunpack.c.l.b16 %v598
      %v607 = vunpack.c.l.b16 %v599
      %v608 = vunpack.c.l.b16 %v600
      %v609 = vunpack.c.l.b16 %v601
      %v610 = vpack.c.b16 %v607, %v606
      %v611 = vpack.c.b16 %v609, %v608
      %614 = vmatprep.subr.bf16.mxu0 0
      %615 = vmatpush1.bf16.msra.mxu0 %v610
      %616 = vmatprep.subr.bf16.mxu0 0
      %617 = vmatpush1.bf16.msra.mxu0 %v611
      %618 = vmatprep.subr.bf16.mxu0 0
      %619 = vmatpush1.bf16.msra.mxu0 0
      %620 = vmatprep.subr.bf16.mxu0 0
      %621 = vmatpush1.bf16.msra.mxu0 0
      %622 = vmatprep.subr.bf16.mxu0 0
      %623 = vmatpush1.bf16.msra.mxu0 0
      %624 = vmatprep.subr.bf16.mxu0 0
      %625 = vmatpush1.bf16.msra.mxu0 0
      %626 = vmatprep.subr.bf16.mxu0 0
      %627 = vmatpush1.bf16.msra.mxu0 0
      %628 = vmatprep.subr.bf16.mxu0 0
      %629 = vmatpush1.bf16.msra.mxu0 0
      %630 = vmatprep.subr.bf16.mxu0 0
      %631 = vmatpush1.bf16.msra.mxu0 0
      %632 = vmatprep.subr.bf16.mxu0 0
      %633 = vmatpush1.bf16.msra.mxu0 0
      %634 = vmatprep.subr.bf16.mxu0 0
      %635 = vmatpush1.bf16.msra.mxu0 0
      %636 = vmatprep.subr.bf16.mxu0 0
      %637 = vmatpush1.bf16.msra.mxu0 0
      %638 = vmatprep.subr.bf16.mxu0 0
      %639 = vmatpush1.bf16.msra.mxu0 0
      %640 = vmatprep.subr.bf16.mxu0 0
      %641 = vmatpush1.bf16.msra.mxu0 0
      %642 = vmatprep.subr.bf16.mxu0 0
      %643 = vmatpush1.bf16.msra.mxu0 0
      %644 = vmatprep.subr.bf16.mxu0 0
      %645 = vmatpush1.bf16.msra.mxu0 0
      %646 = vmatprep.mubr.bf16.mxu0 0
      %647 = vmatmul.mubr.bf16.gmra.mrb[0].mxu0 %v192
      %v648 = vpop.f32.mrb[0].mxu0
      %v649 = vadd.f32 0.0, %v648
      %v650 = vpop.f32.mrb[0].mxu0
      %v651 = vpop.f32.mrb[0].mxu0
      %v652 = vpop.f32.mrb[0].mxu0
      %653 = vdwg.mxu0
      %v654 = vpack.c.bf16 %v649, %v649
      %s655 = scalar_lea.vmem %s171, 28
      %656 = vst.msk [vmem:[%s655] sm:$0xf] %vm235, %v654
      %s657 = scalar_lea.vmem %s1, 128
      %v658 = vld [vmem:[%s657] sm:$0xf]
      %v659 = vld [vmem:[%s657 + $0x4] sm:$0xf]
      %v660 = vld [vmem:[%s657 + $0x8] sm:$0xf]
      %v661 = vld [vmem:[%s657 + $0xc] sm:$0xf]
      %v666 = vunpack.c.l.b16 %v658
      %v667 = vunpack.c.l.b16 %v659
      %v668 = vunpack.c.l.b16 %v660
      %v669 = vunpack.c.l.b16 %v661
      %v670 = vpack.c.b16 %v667, %v666
      %v671 = vpack.c.b16 %v669, %v668
      %674 = vmatprep.subr.bf16.mxu0 0
      %675 = vmatpush1.bf16.msra.mxu0 %v670
      %676 = vmatprep.subr.bf16.mxu0 0
      %677 = vmatpush1.bf16.msra.mxu0 %v671
      %678 = vmatprep.subr.bf16.mxu0 0
      %679 = vmatpush1.bf16.msra.mxu0 0
      %680 = vmatprep.subr.bf16.mxu0 0
      %681 = vmatpush1.bf16.msra.mxu0 0
      %682 = vmatprep.subr.bf16.mxu0 0
      %683 = vmatpush1.bf16.msra.mxu0 0
      %684 = vmatprep.subr.bf16.mxu0 0
      %685 = vmatpush1.bf16.msra.mxu0 0
      %686 = vmatprep.subr.bf16.mxu0 0
      %687 = vmatpush1.bf16.msra.mxu0 0
      %688 = vmatprep.subr.bf16.mxu0 0
      %689 = vmatpush1.bf16.msra.mxu0 0
      %690 = vmatprep.subr.bf16.mxu0 0
      %691 = vmatpush1.bf16.msra.mxu0 0
      %692 = vmatprep.subr.bf16.mxu0 0
      %693 = vmatpush1.bf16.msra.mxu0 0
      %694 = vmatprep.subr.bf16.mxu0 0
      %695 = vmatpush1.bf16.msra.mxu0 0
      %696 = vmatprep.subr.bf16.mxu0 0
      %697 = vmatpush1.bf16.msra.mxu0 0
      %698 = vmatprep.subr.bf16.mxu0 0
      %699 = vmatpush1.bf16.msra.mxu0 0
      %700 = vmatprep.subr.bf16.mxu0 0
      %701 = vmatpush1.bf16.msra.mxu0 0
      %702 = vmatprep.subr.bf16.mxu0 0
      %703 = vmatpush1.bf16.msra.mxu0 0
      %704 = vmatprep.subr.bf16.mxu0 0
      %705 = vmatpush1.bf16.msra.mxu0 0
      %706 = vmatprep.mubr.bf16.mxu0 0
      %707 = vmatmul.mubr.bf16.gmra.mrb[0].mxu0 %v192
      %v708 = vpop.f32.mrb[0].mxu0
      %v709 = vadd.f32 0.0, %v708
      %v710 = vpop.f32.mrb[0].mxu0
      %v711 = vpop.f32.mrb[0].mxu0
      %v712 = vpop.f32.mrb[0].mxu0
      %713 = vdwg.mxu0
      %v714 = vpack.c.bf16 %v709, %v709
      %s715 = scalar_lea.vmem %s171, 32
      %716 = vst.msk [vmem:[%s715] sm:$0xf] %vm235, %v714
      %s717 = scalar_lea.vmem %s1, 144
      %v718 = vld [vmem:[%s717] sm:$0xf]
      %v719 = vld [vmem:[%s717 + $0x4] sm:$0xf]
      %v720 = vld [vmem:[%s717 + $0x8] sm:$0xf]
      %v721 = vld [vmem:[%s717 + $0xc] sm:$0xf]
      %v726 = vunpack.c.l.b16 %v718
      %v727 = vunpack.c.l.b16 %v719
      %v728 = vunpack.c.l.b16 %v720
      %v729 = vunpack.c.l.b16 %v721
      %v730 = vpack.c.b16 %v727, %v726
      %v731 = vpack.c.b16 %v729, %v728
      %734 = vmatprep.subr.bf16.mxu0 0
      %735 = vmatpush1.bf16.msra.mxu0 %v730
      %736 = vmatprep.subr.bf16.mxu0 0
      %737 = vmatpush1.bf16.msra.mxu0 %v731
      %738 = vmatprep.subr.bf16.mxu0 0
      %739 = vmatpush1.bf16.msra.mxu0 0
      %740 = vmatprep.subr.bf16.mxu0 0
      %741 = vmatpush1.bf16.msra.mxu0 0
      %742 = vmatprep.subr.bf16.mxu0 0
      %743 = vmatpush1.bf16.msra.mxu0 0
      %744 = vmatprep.subr.bf16.mxu0 0
      %745 = vmatpush1.bf16.msra.mxu0 0
      %746 = vmatprep.subr.bf16.mxu0 0
      %747 = vmatpush1.bf16.msra.mxu0 0
      %748 = vmatprep.subr.bf16.mxu0 0
      %749 = vmatpush1.bf16.msra.mxu0 0
      %750 = vmatprep.subr.bf16.mxu0 0
      %751 = vmatpush1.bf16.msra.mxu0 0
      %752 = vmatprep.subr.bf16.mxu0 0
      %753 = vmatpush1.bf16.msra.mxu0 0
      %754 = vmatprep.subr.bf16.mxu0 0
      %755 = vmatpush1.bf16.msra.mxu0 0
      %756 = vmatprep.subr.bf16.mxu0 0
      %757 = vmatpush1.bf16.msra.mxu0 0
      %758 = vmatprep.subr.bf16.mxu0 0
      %759 = vmatpush1.bf16.msra.mxu0 0
      %760 = vmatprep.subr.bf16.mxu0 0
      %761 = vmatpush1.bf16.msra.mxu0 0
      %762 = vmatprep.subr.bf16.mxu0 0
      %763 = vmatpush1.bf16.msra.mxu0 0
      %764 = vmatprep.subr.bf16.mxu0 0
      %765 = vmatpush1.bf16.msra.mxu0 0
      %766 = vmatprep.mubr.bf16.mxu0 0
      %767 = vmatmul.mubr.bf16.gmra.mrb[0].mxu0 %v192
      %v768 = vpop.f32.mrb[0].mxu0
      %v769 = vadd.f32 0.0, %v768
      %v770 = vpop.f32.mrb[0].mxu0
      %v771 = vpop.f32.mrb[0].mxu0
      %v772 = vpop.f32.mrb[0].mxu0
      %773 = vdwg.mxu0
      %v774 = vpack.c.bf16 %v769, %v769
      %s775 = scalar_lea.vmem %s171, 36
      %776 = vst.msk [vmem:[%s775] sm:$0xf] %vm235, %v774
      %s777 = scalar_lea.vmem %s1, 160
      %v778 = vld [vmem:[%s777] sm:$0xf]
      %v779 = vld [vmem:[%s777 + $0x4] sm:$0xf]
      %v780 = vld [vmem:[%s777 + $0x8] sm:$0xf]
      %v781 = vld [vmem:[%s777 + $0xc] sm:$0xf]
      %v786 = vunpack.c.l.b16 %v778
      %v787 = vunpack.c.l.b16 %v779
      %v788 = vunpack.c.l.b16 %v780
      %v789 = vunpack.c.l.b16 %v781
      %v790 = vpack.c.b16 %v787, %v786
      %v791 = vpack.c.b16 %v789, %v788
      %794 = vmatprep.subr.bf16.mxu0 0
      %795 = vmatpush1.bf16.msra.mxu0 %v790
      %796 = vmatprep.subr.bf16.mxu0 0
      %797 = vmatpush1.bf16.msra.mxu0 %v791
      %798 = vmatprep.subr.bf16.mxu0 0
      %799 = vmatpush1.bf16.msra.mxu0 0
      %800 = vmatprep.subr.bf16.mxu0 0
      %801 = vmatpush1.bf16.msra.mxu0 0
      %802 = vmatprep.subr.bf16.mxu0 0
      %803 = vmatpush1.bf16.msra.mxu0 0
      %804 = vmatprep.subr.bf16.mxu0 0
      %805 = vmatpush1.bf16.msra.mxu0 0
      %806 = vmatprep.subr.bf16.mxu0 0
      %807 = vmatpush1.bf16.msra.mxu0 0
      %808 = vmatprep.subr.bf16.mxu0 0
      %809 = vmatpush1.bf16.msra.mxu0 0
      %810 = vmatprep.subr.bf16.mxu0 0
      %811 = vmatpush1.bf16.msra.mxu0 0
      %812 = vmatprep.subr.bf16.mxu0 0
      %813 = vmatpush1.bf16.msra.mxu0 0
      %814 = vmatprep.subr.bf16.mxu0 0
      %815 = vmatpush1.bf16.msra.mxu0 0
      %816 = vmatprep.subr.bf16.mxu0 0
      %817 = vmatpush1.bf16.msra.mxu0 0
      %818 = vmatprep.subr.bf16.mxu0 0
      %819 = vmatpush1.bf16.msra.mxu0 0
      %820 = vmatprep.subr.bf16.mxu0 0
      %821 = vmatpush1.bf16.msra.mxu0 0
      %822 = vmatprep.subr.bf16.mxu0 0
      %823 = vmatpush1.bf16.msra.mxu0 0
      %824 = vmatprep.subr.bf16.mxu0 0
      %825 = vmatpush1.bf16.msra.mxu0 0
      %826 = vmatprep.mubr.bf16.mxu0 0
      %827 = vmatmul.mubr.bf16.gmra.mrb[0].mxu0 %v192
      %v828 = vpop.f32.mrb[0].mxu0
      %v829 = vadd.f32 0.0, %v828
      %v830 = vpop.f32.mrb[0].mxu0
      %v831 = vpop.f32.mrb[0].mxu0
      %v832 = vpop.f32.mrb[0].mxu0
      %833 = vdwg.mxu0
      %v834 = vpack.c.bf16 %v829, %v829
      %s835 = scalar_lea.vmem %s171, 40
      %836 = vst.msk [vmem:[%s835] sm:$0xf] %vm235, %v834
      %s837 = scalar_lea.vmem %s1, 176
      %v838 = vld [vmem:[%s837] sm:$0xf]
      %v839 = vld [vmem:[%s837 + $0x4] sm:$0xf]
      %v840 = vld [vmem:[%s837 + $0x8] sm:$0xf]
      %v841 = vld [vmem:[%s837 + $0xc] sm:$0xf]
      %v846 = vunpack.c.l.b16 %v838
      %v847 = vunpack.c.l.b16 %v839
      %v848 = vunpack.c.l.b16 %v840
      %v849 = vunpack.c.l.b16 %v841
      %v850 = vpack.c.b16 %v847, %v846
      %v851 = vpack.c.b16 %v849, %v848
      %854 = vmatprep.subr.bf16.mxu0 0
      %855 = vmatpush1.bf16.msra.mxu0 %v850
      %856 = vmatprep.subr.bf16.mxu0 0
      %857 = vmatpush1.bf16.msra.mxu0 %v851
      %858 = vmatprep.subr.bf16.mxu0 0
      %859 = vmatpush1.bf16.msra.mxu0 0
      %860 = vmatprep.subr.bf16.mxu0 0
      %861 = vmatpush1.bf16.msra.mxu0 0
      %862 = vmatprep.subr.bf16.mxu0 0
      %863 = vmatpush1.bf16.msra.mxu0 0
      %864 = vmatprep.subr.bf16.mxu0 0
      %865 = vmatpush1.bf16.msra.mxu0 0
      %866 = vmatprep.subr.bf16.mxu0 0
      %867 = vmatpush1.bf16.msra.mxu0 0
      %868 = vmatprep.subr.bf16.mxu0 0
      %869 = vmatpush1.bf16.msra.mxu0 0
      %870 = vmatprep.subr.bf16.mxu0 0
      %871 = vmatpush1.bf16.msra.mxu0 0
      %872 = vmatprep.subr.bf16.mxu0 0
      %873 = vmatpush1.bf16.msra.mxu0 0
      %874 = vmatprep.subr.bf16.mxu0 0
      %875 = vmatpush1.bf16.msra.mxu0 0
      %876 = vmatprep.subr.bf16.mxu0 0
      %877 = vmatpush1.bf16.msra.mxu0 0
      %878 = vmatprep.subr.bf16.mxu0 0
      %879 = vmatpush1.bf16.msra.mxu0 0
      %880 = vmatprep.subr.bf16.mxu0 0
      %881 = vmatpush1.bf16.msra.mxu0 0
      %882 = vmatprep.subr.bf16.mxu0 0
      %883 = vmatpush1.bf16.msra.mxu0 0
      %884 = vmatprep.subr.bf16.mxu0 0
      %885 = vmatpush1.bf16.msra.mxu0 0
      %886 = vmatprep.mubr.bf16.mxu0 0
      %887 = vmatmul.mubr.bf16.gmra.mrb[0].mxu0 %v192
      %v888 = vpop.f32.mrb[0].mxu0
      %v889 = vadd.f32 0.0, %v888
      %v890 = vpop.f32.mrb[0].mxu0
      %v891 = vpop.f32.mrb[0].mxu0
      %v892 = vpop.f32.mrb[0].mxu0
      %893 = vdwg.mxu0
      %v894 = vpack.c.bf16 %v889, %v889
      %s895 = scalar_lea.vmem %s171, 44
      %896 = vst.msk [vmem:[%s895] sm:$0xf] %vm235, %v894
      %p897 = scmp.lt.s32.totalorder %s17, 1
      %s898 = scalar_select %p897, %s17, 1
      %p899 = scmp.lt.s32.totalorder %s18, 0
      %s900 = scalar_select %p899, %s18, 0
      %s901 = smul.addr %s898, 12
      %s902 = sadd.s32 %s900, %s901
      %s903 = smul.addr %s902, 4
      %s904 = scalar_lea.vmem %s2, %s903
      // Predicated region
      $region29: #{tpu_custom_call.1} parent=27 // pred_check
        %p905 = pneg %p94
      $region30: #{tpu_custom_call.1} parent=27 // pred_check_branch
        %907 = sbr.rel (%p905) target = $region32
      $region31: #{tpu_custom_call.1} parent=27 // pred_region
        _
      $region32: #{tpu_custom_call.1} parent=27 // pred_fallthru
        _
    $region28: #{tpu_custom_call.1} parent=5 // pred_fallthru
      _
    %p908 = scmp.le.s32.totalorder 2, %s8
    // Predicated region
    $region33: #{tpu_custom_call.1} parent=5 // pred_check
      %p909 = pneg %p908
    $region34: #{tpu_custom_call.1} parent=5 // pred_check_branch
      %911 = sbr.rel (%p909) target = $region36
    $region35: #{tpu_custom_call.1} parent=5 // pred_region
      %s912 = ssub.s32 %s8, 2
      // Predicated region
      $region37: #{tpu_custom_call.1} parent=35 // pred_check
        %p913 = pneg %p100
      $region38: #{tpu_custom_call.1} parent=35 // pred_check_branch
        %915 = sbr.rel (%p913) target = $region40
      $region39: #{tpu_custom_call.1} parent=35 // pred_region
        %p916 = scmp.lt.s32.totalorder %s19, 1
        %s917 = scalar_select %p916, %s19, 1
        %p918 = scmp.lt.s32.totalorder %s20, 0
        %s919 = scalar_select %p918, %s20, 0
        %s920 = smul.addr %s917, 12
        %s921 = sadd.s32 %s919, %s920
        %s922 = smul.addr %s921, 4
        %s923 = scalar_lea.vmem %s2, %s922
      $region40: #{tpu_custom_call.1} parent=35 // pred_fallthru
        _
    $region36: #{tpu_custom_call.1} parent=5 // pred_fallthru
      _
  $region6: #{tpu_custom_call.1} parent=0 // loop_footer
    %s12 = sadd.s32 1, %s8
  $region7: #{tpu_custom_call.1} parent=0 // loop_footer_branch
    %7 = sbr.rel target = $region3
  $region8: #{tpu_custom_call.1} parent=0 // loop_exit
    _

</llo_original>
